<compile_context>
chip_gen: v6e
topology: v6e:2x2x1
jax: 0.10.0
libtpu: 0.0.40
codegen_flags: <defaults>
</compile_context>

<pallas_src>
import functools

import jax
import jax.numpy as jnp
from jax import lax
from jax.experimental import pallas as pl
from jax.experimental.pallas import tpu as pltpu


def _bottleneck_kernel(x_ref, row_ref, col_ref, w1_ref, b1_ref, wdw_ref,
                       b2_ref, w3_ref, b3_ref, o_ref, *, H, W, use_residual):
    x = x_ref[0]                                    # (Cin, P) f32, P = H*W
    P = x.shape[-1]

    # ---- conv1: 1x1 pointwise == (Cmid,Cin)@(Cin,P) on the MXU, BN, relu6 --
    m = jnp.dot(w1_ref[...], x.astype(jnp.bfloat16),
                preferred_element_type=jnp.float32)          # (Cmid, P)
    m = jnp.clip(m + b1_ref[...], 0.0, 6.0)

    # ---- dwconv2: 3x3 depthwise, pad 1 (stride handled in the wrapper) -----
    # Each tap is a lane shift of the row-major flattened spatial axis; border
    # validity comes from precomputed row/col index vectors (no int div/mod
    # and no padded scratch needed).
    row = row_ref[...]                               # (1, P) int32
    col = col_ref[...]                               # (1, P) int32
    row_ok = {-1: row >= 1, 0: None, 1: row <= H - 2}
    col_ok = {-1: col >= 1, 0: None, 1: col <= W - 2}

    wdw = wdw_ref[...]                               # (Cmid, 9) f32, BN-folded
    acc = m * wdw[:, 4:5]                            # center tap (di = dj = 0)
    for di in (-1, 0, 1):
        for dj in (-1, 0, 1):
            if di == 0 and dj == 0:
                continue
            off = di * W + dj                        # flat offset of this tap
            tap = pltpu.roll(m, (-off) % P, axis=1)  # tap[p] = m[p + off]
            rm, cm = row_ok[di], col_ok[dj]
            mask = rm if cm is None else (cm if rm is None else rm & cm)
            k = (di + 1) * 3 + (dj + 1)
            acc = acc + jnp.where(mask, tap, 0.0) * wdw[:, k:k + 1]
    acc = jnp.clip(acc + b2_ref[...], 0.0, 6.0)

    # ---- conv3: 1x1 pointwise + BN (no activation) + optional residual -----
    y = jnp.dot(w3_ref[...], acc.astype(jnp.bfloat16),
                preferred_element_type=jnp.float32)          # (Cout, P)
    y = y + b3_ref[...]
    if use_residual:
        y = y + x
    o_ref[0] = y.astype(o_ref.dtype)


def bottleneck_forward(x_nchw, params, *, stride, use_residual):
    assert not (use_residual and stride != 1)
    N, Cin, H, W = x_nchw.shape
    P = H * W
    Cout = params["w3"].shape[0]

    x = x_nchw.reshape(N, Cin, P)                    # pure reshape, no transpose
    row_ids = jnp.repeat(jnp.arange(H, dtype=jnp.int32), W).reshape(1, P)
    col_ids = jnp.tile(jnp.arange(W, dtype=jnp.int32), H).reshape(1, P)

    kernel = functools.partial(_bottleneck_kernel, H=H, W=W,
                               use_residual=use_residual)

    def _full(a):
        return pl.BlockSpec(a.shape, lambda n: (0,) * a.ndim)

    out = pl.pallas_call(
        kernel,
        out_shape=jax.ShapeDtypeStruct((N, Cout, P), x_nchw.dtype),
        grid=(N,),
        in_specs=[
            pl.BlockSpec((1, Cin, P), lambda n: (n, 0, 0)),   # per-image input
            _full(row_ids), _full(col_ids),
            _full(params["w1"]), _full(params["b1"]),
            _full(params["wdw"]), _full(params["b2"]),
            _full(params["w3"]), _full(params["b3"]),
        ],
        out_specs=pl.BlockSpec((1, Cout, P), lambda n: (n, 0, 0)),
        compiler_params=pltpu.CompilerParams(
            dimension_semantics=("parallel",)),               # v7x: 2 TCs
    )(x, row_ids, col_ids,
      params["w1"], params["b1"], params["wdw"], params["b2"],
      params["w3"], params["b3"])

    out = out.reshape(N, Cout, H, W)
    if stride != 1:
        # dw(3x3, pad 1, stride s) then pointwise conv == stride-1 result
        # sampled at (s*i, s*j); exact decimation, residual never applies here.
        out = out[:, :, ::stride, ::stride]
    return out


# ------------------------- parameter construction ---------------------------

def make_params(key, in_c, out_c, expansion, eps=1e-5):
    mid_c = in_c * expansion
    keys = jax.random.split(key, 15)

    def bn_init(k0, k1, k2, k3, c):
        gamma = jax.random.uniform(k0, (c,), jnp.float32, 0.5, 1.5)
        beta = 0.1 * jax.random.normal(k1, (c,), jnp.float32)
        mean = 0.1 * jax.random.normal(k2, (c,), jnp.float32)
        var = jax.random.uniform(k3, (c,), jnp.float32, 0.5, 1.5)
        return gamma, beta, mean, var

    w1 = 0.1 * jax.random.normal(keys[0], (in_c, mid_c), jnp.float32)   # Cin,Cmid
    wdw = 0.1 * jax.random.normal(keys[1], (9, mid_c), jnp.float32)     # tap,Cmid
    w3 = 0.1 * jax.random.normal(keys[2], (mid_c, out_c), jnp.float32)  # Cmid,Cout
    bn1 = bn_init(*keys[3:7], mid_c)
    bn2 = bn_init(*keys[7:11], mid_c)
    bn3 = bn_init(*keys[11:15], out_c)
    raw = dict(w1=w1, wdw=wdw, w3=w3, bn1=bn1, bn2=bn2, bn3=bn3)

    def fold(bn):
        gamma, beta, mean, var = bn
        scale = gamma / jnp.sqrt(var + eps)
        return scale, beta - mean * scale

    s1, b1 = fold(bn1)
    s2, b2 = fold(bn2)
    s3, b3 = fold(bn3)

    # Channels-major weights with the BN scale folded in; matmul weights bf16.
    params = dict(
        w1=(w1.T * s1[:, None]).astype(jnp.bfloat16),   # (Cmid, Cin)
        b1=b1[:, None],                                 # (Cmid, 1) f32
        wdw=(wdw.T * s2[:, None]),                      # (Cmid, 9) f32
        b2=b2[:, None],                                 # (Cmid, 1) f32
        w3=(w3.T * s3[:, None]).astype(jnp.bfloat16),   # (Cout, Cmid)
        b3=b3[:, None],                                 # (Cout, 1) f32
    )
    return params, raw


# ----------------------------- pure-JAX reference ---------------------------

def ref_forward(x_nchw, raw, *, stride, use_residual, eps=1e-5):
    x = jnp.transpose(x_nchw, (0, 2, 3, 1))
    dn = ("NHWC", "HWIO", "NHWC")

    def bn(v, p):
        gamma, beta, mean, var = p
        return (v - mean) * (gamma / jnp.sqrt(var + eps)) + beta

    cin, cmid = raw["w1"].shape
    cout = raw["w3"].shape[1]

    m = lax.conv_general_dilated(x, raw["w1"].reshape(1, 1, cin, cmid),
                                 (1, 1), "VALID", dimension_numbers=dn)
    m = jnp.clip(bn(m, raw["bn1"]), 0.0, 6.0)

    m = lax.conv_general_dilated(m, raw["wdw"].reshape(3, 3, 1, cmid),
                                 (stride, stride), ((1, 1), (1, 1)),
                                 dimension_numbers=dn,
                                 feature_group_count=cmid)
    m = jnp.clip(bn(m, raw["bn2"]), 0.0, 6.0)

    m = lax.conv_general_dilated(m, raw["w3"].reshape(1, 1, cmid, cout),
                                 (1, 1), "VALID", dimension_numbers=dn)
    m = bn(m, raw["bn3"])

    if use_residual:
        m = m + x
    return jnp.transpose(m, (0, 3, 1, 2))


if __name__ == "__main__":
    # Bottleneck(in_channels=8, out_channels=8, expansion_factor=2, stride=1)
    # -> mid_channels = 16, use_residual = True
    N, Cin, Cout, EXP, H, W = 2, 8, 8, 2, 16, 16
    STRIDE = 1
    USE_RESIDUAL = (STRIDE == 1 and Cin == Cout)

    key = jax.random.PRNGKey(0)
    kx, kp = jax.random.split(key)
    x = jax.random.normal(kx, (N, Cin, H, W), jnp.float32)   # NCHW like PyTorch
    params, raw = make_params(kp, Cin, Cout, EXP)

    out = bottleneck_forward(x, params, stride=STRIDE, use_residual=USE_RESIDUAL)
    out = jax.block_until_ready(out)

    expected = ref_forward(x, raw, stride=STRIDE, use_residual=USE_RESIDUAL)
    assert out.shape == expected.shape == (N, Cout, H // STRIDE, W // STRIDE)
    max_err = float(jnp.max(jnp.abs(out - expected)))
    # bf16 matmul operands vs. the f32 reference -> expect ~1e-3 error.
    assert max_err < 3e-2, max_err

    print("KERNEL_OK")
</pallas_src>

<mosaic_0001>
module attributes {stable_mosaic.version = 11 : i64} {
  func.func @_bottleneck_kernel(%arg0: i32, %arg1: memref<1x8x256xf32, #tpu.memory_space<vmem>>, %arg2: memref<1x256xi32, #tpu.memory_space<vmem>>, %arg3: memref<1x256xi32, #tpu.memory_space<vmem>>, %arg4: memref<16x8xbf16, #tpu.memory_space<vmem>>, %arg5: memref<16x1xf32, #tpu.memory_space<vmem>>, %arg6: memref<16x9xf32, #tpu.memory_space<vmem>>, %arg7: memref<16x1xf32, #tpu.memory_space<vmem>>, %arg8: memref<8x16xbf16, #tpu.memory_space<vmem>>, %arg9: memref<8x1xf32, #tpu.memory_space<vmem>>, %arg10: memref<1x8x256xf32, #tpu.memory_space<vmem>>) attributes {dimension_semantics = [#tpu.dimension_semantics<parallel>], iteration_bounds = array<i64: 2>, scalar_prefetch = 0 : i64, scratch_operands = 0 : i64, tpu.core_type = #tpu.core_type<tc>, window_params = [{transform_indices = @transform_0, window_bounds = array<i64: 1, 8, 256>}, {pipeline_mode = #tpu.pipeline_mode<synchronous>, transform_indices = @transform_1, window_bounds = array<i64: 1, 256>}, {pipeline_mode = #tpu.pipeline_mode<synchronous>, transform_indices = @transform_2, window_bounds = array<i64: 1, 256>}, {pipeline_mode = #tpu.pipeline_mode<synchronous>, transform_indices = @transform_3, window_bounds = array<i64: 16, 8>}, {pipeline_mode = #tpu.pipeline_mode<synchronous>, transform_indices = @transform_4, window_bounds = array<i64: 16, 1>}, {pipeline_mode = #tpu.pipeline_mode<synchronous>, transform_indices = @transform_5, window_bounds = array<i64: 16, 9>}, {pipeline_mode = #tpu.pipeline_mode<synchronous>, transform_indices = @transform_6, window_bounds = array<i64: 16, 1>}, {pipeline_mode = #tpu.pipeline_mode<synchronous>, transform_indices = @transform_7, window_bounds = array<i64: 8, 16>}, {pipeline_mode = #tpu.pipeline_mode<synchronous>, transform_indices = @transform_8, window_bounds = array<i64: 8, 1>}, {transform_indices = @transform_9, window_bounds = array<i64: 1, 8, 256>}]} {
    %c0 = arith.constant 0 : index
    %c0_0 = arith.constant 0 : index
    %c0_1 = arith.constant 0 : index
    %0 = vector.load %arg1[%c0, %c0_0, %c0_1] : memref<1x8x256xf32, #tpu.memory_space<vmem>>, vector<1x8x256xf32>
    %1 = vector.shape_cast %0 : vector<1x8x256xf32> to vector<8x256xf32>
    %c0_2 = arith.constant 0 : index
    %c0_3 = arith.constant 0 : index
    %2 = vector.load %arg4[%c0_2, %c0_3] : memref<16x8xbf16, #tpu.memory_space<vmem>>, vector<16x8xbf16>
    %3 = arith.truncf %1 : vector<8x256xf32> to vector<8x256xbf16>
    %cst = arith.constant dense<0.000000e+00> : vector<16x256xf32>
    %4 = tpu.matmul %2, %3, %cst {dimension_numbers = #tpu.dot_dimension_numbers<[1], [0], [0], [1], [0, 0, 1, 1], [], []>} : vector<16x8xbf16>, vector<8x256xbf16>, vector<16x256xf32> -> vector<16x256xf32>
    %c0_4 = arith.constant 0 : index
    %c0_5 = arith.constant 0 : index
    %5 = vector.load %arg5[%c0_4, %c0_5] : memref<16x1xf32, #tpu.memory_space<vmem>>, vector<16x1xf32>
    %6 = vector.broadcast %5 : vector<16x1xf32> to vector<16x256xf32>
    %7 = arith.addf %4, %6 : vector<16x256xf32>
    %cst_6 = arith.constant 0.000000e+00 : f32
    %cst_7 = arith.constant 6.000000e+00 : f32
    %8 = vector.broadcast %cst_6 : f32 to vector<16x256xf32>
    %9 = arith.maximumf %8, %7 : vector<16x256xf32>
    %10 = vector.broadcast %cst_7 : f32 to vector<16x256xf32>
    %11 = arith.minimumf %10, %9 : vector<16x256xf32>
    %c0_8 = arith.constant 0 : index
    %c0_9 = arith.constant 0 : index
    %12 = vector.load %arg2[%c0_8, %c0_9] : memref<1x256xi32, #tpu.memory_space<vmem>>, vector<1x256xi32>
    %c0_10 = arith.constant 0 : index
    %c0_11 = arith.constant 0 : index
    %13 = vector.load %arg3[%c0_10, %c0_11] : memref<1x256xi32, #tpu.memory_space<vmem>>, vector<1x256xi32>
    %c1_i32 = arith.constant 1 : i32
    %14 = vector.broadcast %c1_i32 : i32 to vector<1x256xi32>
    %15 = arith.cmpi sge, %12, %14 : vector<1x256xi32>
    %c14_i32 = arith.constant 14 : i32
    %16 = vector.broadcast %c14_i32 : i32 to vector<1x256xi32>
    %17 = arith.cmpi sle, %12, %16 : vector<1x256xi32>
    %c1_i32_12 = arith.constant 1 : i32
    %18 = vector.broadcast %c1_i32_12 : i32 to vector<1x256xi32>
    %19 = arith.cmpi sge, %13, %18 : vector<1x256xi32>
    %c14_i32_13 = arith.constant 14 : i32
    %20 = vector.broadcast %c14_i32_13 : i32 to vector<1x256xi32>
    %21 = arith.cmpi sle, %13, %20 : vector<1x256xi32>
    %c0_14 = arith.constant 0 : index
    %c0_15 = arith.constant 0 : index
    %22 = vector.load %arg6[%c0_14, %c0_15] : memref<16x9xf32, #tpu.memory_space<vmem>>, vector<16x9xf32>
    %23 = vector.extract_strided_slice %22 {offsets = [0, 4], sizes = [16, 1], strides = [1, 1]} : vector<16x9xf32> to vector<16x1xf32>
    %24 = vector.broadcast %23 : vector<16x1xf32> to vector<16x256xf32>
    %25 = arith.mulf %11, %24 : vector<16x256xf32>
    %c17_i32 = arith.constant 17 : i32
    %26 = tpu.dynamic_rotate %11 by %c17_i32 dim 1 : vector<16x256xf32>, i32 -> vector<16x256xf32>
    %27 = arith.andi %15, %19 : vector<1x256xi1>
    %cst_16 = arith.constant 0.000000e+00 : f32
    %28 = vector.shape_cast %27 : vector<1x256xi1> to vector<1x256xi1>
    %29 = vector.broadcast %28 : vector<1x256xi1> to vector<16x256xi1>
    %30 = vector.broadcast %cst_16 : f32 to vector<16x256xf32>
    %31 = arith.select %29, %26, %30 : vector<16x256xi1>, vector<16x256xf32>
    %32 = vector.extract_strided_slice %22 {offsets = [0, 0], sizes = [16, 1], strides = [1, 1]} : vector<16x9xf32> to vector<16x1xf32>
    %33 = vector.broadcast %32 : vector<16x1xf32> to vector<16x256xf32>
    %34 = arith.mulf %31, %33 : vector<16x256xf32>
    %35 = arith.addf %25, %34 : vector<16x256xf32>
    %c16_i32 = arith.constant 16 : i32
    %36 = tpu.dynamic_rotate %11 by %c16_i32 dim 1 : vector<16x256xf32>, i32 -> vector<16x256xf32>
    %cst_17 = arith.constant 0.000000e+00 : f32
    %37 = vector.shape_cast %15 : vector<1x256xi1> to vector<1x256xi1>
    %38 = vector.broadcast %37 : vector<1x256xi1> to vector<16x256xi1>
    %39 = vector.broadcast %cst_17 : f32 to vector<16x256xf32>
    %40 = arith.select %38, %36, %39 : vector<16x256xi1>, vector<16x256xf32>
    %41 = vector.extract_strided_slice %22 {offsets = [0, 1], sizes = [16, 1], strides = [1, 1]} : vector<16x9xf32> to vector<16x1xf32>
    %42 = vector.broadcast %41 : vector<16x1xf32> to vector<16x256xf32>
    %43 = arith.mulf %40, %42 : vector<16x256xf32>
    %44 = arith.addf %35, %43 : vector<16x256xf32>
    %c15_i32 = arith.constant 15 : i32
    %45 = tpu.dynamic_rotate %11 by %c15_i32 dim 1 : vector<16x256xf32>, i32 -> vector<16x256xf32>
    %46 = arith.andi %15, %21 : vector<1x256xi1>
    %cst_18 = arith.constant 0.000000e+00 : f32
    %47 = vector.shape_cast %46 : vector<1x256xi1> to vector<1x256xi1>
    %48 = vector.broadcast %47 : vector<1x256xi1> to vector<16x256xi1>
    %49 = vector.broadcast %cst_18 : f32 to vector<16x256xf32>
    %50 = arith.select %48, %45, %49 : vector<16x256xi1>, vector<16x256xf32>
    %51 = vector.extract_strided_slice %22 {offsets = [0, 2], sizes = [16, 1], strides = [1, 1]} : vector<16x9xf32> to vector<16x1xf32>
    %52 = vector.broadcast %51 : vector<16x1xf32> to vector<16x256xf32>
    %53 = arith.mulf %50, %52 : vector<16x256xf32>
    %54 = arith.addf %44, %53 : vector<16x256xf32>
    %c1_i32_19 = arith.constant 1 : i32
    %55 = tpu.dynamic_rotate %11 by %c1_i32_19 dim 1 : vector<16x256xf32>, i32 -> vector<16x256xf32>
    %cst_20 = arith.constant 0.000000e+00 : f32
    %56 = vector.shape_cast %19 : vector<1x256xi1> to vector<1x256xi1>
    %57 = vector.broadcast %56 : vector<1x256xi1> to vector<16x256xi1>
    %58 = vector.broadcast %cst_20 : f32 to vector<16x256xf32>
    %59 = arith.select %57, %55, %58 : vector<16x256xi1>, vector<16x256xf32>
    %60 = vector.extract_strided_slice %22 {offsets = [0, 3], sizes = [16, 1], strides = [1, 1]} : vector<16x9xf32> to vector<16x1xf32>
    %61 = vector.broadcast %60 : vector<16x1xf32> to vector<16x256xf32>
    %62 = arith.mulf %59, %61 : vector<16x256xf32>
    %63 = arith.addf %54, %62 : vector<16x256xf32>
    %c255_i32 = arith.constant 255 : i32
    %64 = tpu.dynamic_rotate %11 by %c255_i32 dim 1 : vector<16x256xf32>, i32 -> vector<16x256xf32>
    %cst_21 = arith.constant 0.000000e+00 : f32
    %65 = vector.shape_cast %21 : vector<1x256xi1> to vector<1x256xi1>
    %66 = vector.broadcast %65 : vector<1x256xi1> to vector<16x256xi1>
    %67 = vector.broadcast %cst_21 : f32 to vector<16x256xf32>
    %68 = arith.select %66, %64, %67 : vector<16x256xi1>, vector<16x256xf32>
    %69 = vector.extract_strided_slice %22 {offsets = [0, 5], sizes = [16, 1], strides = [1, 1]} : vector<16x9xf32> to vector<16x1xf32>
    %70 = vector.broadcast %69 : vector<16x1xf32> to vector<16x256xf32>
    %71 = arith.mulf %68, %70 : vector<16x256xf32>
    %72 = arith.addf %63, %71 : vector<16x256xf32>
    %c241_i32 = arith.constant 241 : i32
    %73 = tpu.dynamic_rotate %11 by %c241_i32 dim 1 : vector<16x256xf32>, i32 -> vector<16x256xf32>
    %74 = arith.andi %17, %19 : vector<1x256xi1>
    %cst_22 = arith.constant 0.000000e+00 : f32
    %75 = vector.shape_cast %74 : vector<1x256xi1> to vector<1x256xi1>
    %76 = vector.broadcast %75 : vector<1x256xi1> to vector<16x256xi1>
    %77 = vector.broadcast %cst_22 : f32 to vector<16x256xf32>
    %78 = arith.select %76, %73, %77 : vector<16x256xi1>, vector<16x256xf32>
    %79 = vector.extract_strided_slice %22 {offsets = [0, 6], sizes = [16, 1], strides = [1, 1]} : vector<16x9xf32> to vector<16x1xf32>
    %80 = vector.broadcast %79 : vector<16x1xf32> to vector<16x256xf32>
    %81 = arith.mulf %78, %80 : vector<16x256xf32>
    %82 = arith.addf %72, %81 : vector<16x256xf32>
    %c240_i32 = arith.constant 240 : i32
    %83 = tpu.dynamic_rotate %11 by %c240_i32 dim 1 : vector<16x256xf32>, i32 -> vector<16x256xf32>
    %cst_23 = arith.constant 0.000000e+00 : f32
    %84 = vector.shape_cast %17 : vector<1x256xi1> to vector<1x256xi1>
    %85 = vector.broadcast %84 : vector<1x256xi1> to vector<16x256xi1>
    %86 = vector.broadcast %cst_23 : f32 to vector<16x256xf32>
    %87 = arith.select %85, %83, %86 : vector<16x256xi1>, vector<16x256xf32>
    %88 = vector.extract_strided_slice %22 {offsets = [0, 7], sizes = [16, 1], strides = [1, 1]} : vector<16x9xf32> to vector<16x1xf32>
    %89 = vector.broadcast %88 : vector<16x1xf32> to vector<16x256xf32>
    %90 = arith.mulf %87, %89 : vector<16x256xf32>
    %91 = arith.addf %82, %90 : vector<16x256xf32>
    %c239_i32 = arith.constant 239 : i32
    %92 = tpu.dynamic_rotate %11 by %c239_i32 dim 1 : vector<16x256xf32>, i32 -> vector<16x256xf32>
    %93 = arith.andi %17, %21 : vector<1x256xi1>
    %cst_24 = arith.constant 0.000000e+00 : f32
    %94 = vector.shape_cast %93 : vector<1x256xi1> to vector<1x256xi1>
    %95 = vector.broadcast %94 : vector<1x256xi1> to vector<16x256xi1>
    %96 = vector.broadcast %cst_24 : f32 to vector<16x256xf32>
    %97 = arith.select %95, %92, %96 : vector<16x256xi1>, vector<16x256xf32>
    %98 = vector.extract_strided_slice %22 {offsets = [0, 8], sizes = [16, 1], strides = [1, 1]} : vector<16x9xf32> to vector<16x1xf32>
    %99 = vector.broadcast %98 : vector<16x1xf32> to vector<16x256xf32>
    %100 = arith.mulf %97, %99 : vector<16x256xf32>
    %101 = arith.addf %91, %100 : vector<16x256xf32>
    %c0_25 = arith.constant 0 : index
    %c0_26 = arith.constant 0 : index
    %102 = vector.load %arg7[%c0_25, %c0_26] : memref<16x1xf32, #tpu.memory_space<vmem>>, vector<16x1xf32>
    %103 = vector.broadcast %102 : vector<16x1xf32> to vector<16x256xf32>
    %104 = arith.addf %101, %103 : vector<16x256xf32>
    %cst_27 = arith.constant 0.000000e+00 : f32
    %cst_28 = arith.constant 6.000000e+00 : f32
    %105 = vector.broadcast %cst_27 : f32 to vector<16x256xf32>
    %106 = arith.maximumf %105, %104 : vector<16x256xf32>
    %107 = vector.broadcast %cst_28 : f32 to vector<16x256xf32>
    %108 = arith.minimumf %107, %106 : vector<16x256xf32>
    %c0_29 = arith.constant 0 : index
    %c0_30 = arith.constant 0 : index
    %109 = vector.load %arg8[%c0_29, %c0_30] : memref<8x16xbf16, #tpu.memory_space<vmem>>, vector<8x16xbf16>
    %110 = arith.truncf %108 : vector<16x256xf32> to vector<16x256xbf16>
    %cst_31 = arith.constant dense<0.000000e+00> : vector<8x256xf32>
    %111 = tpu.matmul %109, %110, %cst_31 {dimension_numbers = #tpu.dot_dimension_numbers<[1], [0], [0], [1], [0, 0, 1, 1], [], []>} : vector<8x16xbf16>, vector<16x256xbf16>, vector<8x256xf32> -> vector<8x256xf32>
    %c0_32 = arith.constant 0 : index
    %c0_33 = arith.constant 0 : index
    %112 = vector.load %arg9[%c0_32, %c0_33] : memref<8x1xf32, #tpu.memory_space<vmem>>, vector<8x1xf32>
    %113 = vector.broadcast %112 : vector<8x1xf32> to vector<8x256xf32>
    %114 = arith.addf %111, %113 : vector<8x256xf32>
    %115 = arith.addf %114, %1 : vector<8x256xf32>
    %c0_34 = arith.constant 0 : index
    %c0_35 = arith.constant 0 : index
    %c0_36 = arith.constant 0 : index
    %116 = vector.load %arg10[%c0_34, %c0_35, %c0_36] : memref<1x8x256xf32, #tpu.memory_space<vmem>>, vector<1x8x256xf32>
    %117 = vector.shape_cast %116 : vector<1x8x256xf32> to vector<8x256xf32>
    %118 = vector.shape_cast %115 : vector<8x256xf32> to vector<1x8x256xf32>
    tpu.vector_store %arg10[%c0_34, %c0_35, %c0_36], %118 {strides = array<i32>} : memref<1x8x256xf32, #tpu.memory_space<vmem>>, vector<1x8x256xf32>,
    return
  }
  func.func @transform_0(%arg0: i32) -> (i32, i32, i32) {
    %c0_i32 = arith.constant 0 : i32
    %c0_i32_0 = arith.constant 0 : i32
    %c0_i32_1 = arith.constant 0 : i32
    return %arg0, %c0_i32, %c0_i32_0 : i32, i32, i32
  }
  func.func @transform_1(%arg0: i32) -> (i32, i32) {
    %c0_i32 = arith.constant 0 : i32
    %c0_i32_0 = arith.constant 0 : i32
    %c0_i32_1 = arith.constant 0 : i32
    return %c0_i32, %c0_i32_0 : i32, i32
  }
  func.func @transform_2(%arg0: i32) -> (i32, i32) {
    %c0_i32 = arith.constant 0 : i32
    %c0_i32_0 = arith.constant 0 : i32
    %c0_i32_1 = arith.constant 0 : i32
    return %c0_i32, %c0_i32_0 : i32, i32
  }
  func.func @transform_3(%arg0: i32) -> (i32, i32) {
    %c0_i32 = arith.constant 0 : i32
    %c0_i32_0 = arith.constant 0 : i32
    %c0_i32_1 = arith.constant 0 : i32
    return %c0_i32, %c0_i32_0 : i32, i32
  }
  func.func @transform_4(%arg0: i32) -> (i32, i32) {
    %c0_i32 = arith.constant 0 : i32
    %c0_i32_0 = arith.constant 0 : i32
    %c0_i32_1 = arith.constant 0 : i32
    return %c0_i32, %c0_i32_0 : i32, i32
  }
  func.func @transform_5(%arg0: i32) -> (i32, i32) {
    %c0_i32 = arith.constant 0 : i32
    %c0_i32_0 = arith.constant 0 : i32
    %c0_i32_1 = arith.constant 0 : i32
    return %c0_i32, %c0_i32_0 : i32, i32
  }
  func.func @transform_6(%arg0: i32) -> (i32, i32) {
    %c0_i32 = arith.constant 0 : i32
    %c0_i32_0 = arith.constant 0 : i32
    %c0_i32_1 = arith.constant 0 : i32
    return %c0_i32, %c0_i32_0 : i32, i32
  }
  func.func @transform_7(%arg0: i32) -> (i32, i32) {
    %c0_i32 = arith.constant 0 : i32
    %c0_i32_0 = arith.constant 0 : i32
    %c0_i32_1 = arith.constant 0 : i32
    return %c0_i32, %c0_i32_0 : i32, i32
  }
  func.func @transform_8(%arg0: i32) -> (i32, i32) {
    %c0_i32 = arith.constant 0 : i32
    %c0_i32_0 = arith.constant 0 : i32
    %c0_i32_1 = arith.constant 0 : i32
    return %c0_i32, %c0_i32_0 : i32, i32
  }
  func.func @transform_9(%arg0: i32) -> (i32, i32, i32) {
    %c0_i32 = arith.constant 0 : i32
    %c0_i32_0 = arith.constant 0 : i32
    %c0_i32_1 = arith.constant 0 : i32
    return %arg0, %c0_i32, %c0_i32_0 : i32, i32, i32
  }
}

</mosaic_0001>

<llo_original>
// kernel: tpu_custom_call.1
$region0: #{tpu_custom_call.1}
  #allocation0 [shape = 'u32[]', space=smem, size = 0x4, offset = 0x4, fixed_abs, tag = 'smem constant byte address 0x4 - core index']
  #allocation1 [shape = 'u32[144,128]{1,0:T(1,128)}', space=vmem, size = 0x12000, scoped, tag = 'internal scratch']
  %s0 = inlined_call_operand.vmem [shape: f32[2,8,256], index: 0, kind: input, shape index: {}]
  %s1 = inlined_call_operand.vmem [shape: s32[1,256], index: 1, kind: input, shape index: {}]
  %s2 = inlined_call_operand.vmem [shape: s32[1,256], index: 2, kind: input, shape index: {}]
  %s3 = inlined_call_operand.vmem [shape: bf16[16,8], index: 3, kind: input, shape index: {}]
  %s4 = inlined_call_operand.vmem [shape: f32[16,1], index: 4, kind: input, shape index: {}]
  %s5 = inlined_call_operand.vmem [shape: f32[16,9], index: 5, kind: input, shape index: {}]
  %s6 = inlined_call_operand.vmem [shape: f32[16,1], index: 6, kind: input, shape index: {}]
  %s7 = inlined_call_operand.vmem [shape: bf16[8,16], index: 7, kind: input, shape index: {}]
  %s8 = inlined_call_operand.vmem [shape: f32[8,1], index: 8, kind: input, shape index: {}]
  %s9 = inlined_call_operand.hbm [shape: f32[2,8,256], index: 9, kind: output, shape index: {}]
  %s10 = sld [smem:[#allocation0]]
  $region69: #{tpu_custom_call.1} parent=0
    _
  %s12 = ssub.s32 1, %s10
  %s13 = scalar_select 0, %s12, %s10
  $region1: #{tpu_custom_call.1} parent=0
    #allocation2 [shape = 'u8[16384]{0}', space=vmem, size = 0x4000, scoped, tag = 'output window, operand 0']
    #allocation3 [shape = 's32[2]{0}', space=sflag, size = 0x8, scoped, tag = 'scoped memory for tpu_custom_call.1']
    %14 = vsyncpa [#allocation3], 0
    %s15 = scalar_lea.sflag [#allocation3], 1
    %16 = vsyncpa %s15, 0
    loop: start=0, step=1, limit=4
    $region2: #{tpu_custom_call.1} parent=1 // loop_pre_header
      _
    $region3: #{tpu_custom_call.1} parent=1 // loop_header
      %s18 = sphi 0, %s22
      %p19 = scmp.ge.s32.totalorder %s18, 4
      %s28 = sphi 0, %s30
      %s31 = sphi 0, %s28
      %s32 = sphi 0, %s31
      %s48 = sphi 0, %s32
      %s52 = sphi 0, %s52
      %s54 = sphi 0, %s52
      %s55 = sphi 0, %s54
      %s69 = sphi 0, %s55
      %s73 = sphi 0, %s73
      %s75 = sphi 0, %s73
      %s76 = sphi 0, %s75
      %s90 = sphi 0, %s76
      %s94 = sphi 0, %s94
      %s96 = sphi 0, %s94
      %s97 = sphi 0, %s96
      %s111 = sphi 0, %s97
      %s115 = sphi 0, %s115
      %s117 = sphi 0, %s115
      %s118 = sphi 0, %s117
      %s132 = sphi 0, %s118
      %s136 = sphi 0, %s136
      %s138 = sphi 0, %s136
      %s139 = sphi 0, %s138
      %s153 = sphi 0, %s139
      %s157 = sphi 0, %s157
      %s159 = sphi 0, %s157
      %s160 = sphi 0, %s159
      %s174 = sphi 0, %s160
      %s178 = sphi 0, %s178
      %s180 = sphi 0, %s178
      %s181 = sphi 0, %s180
      %s195 = sphi 0, %s181
      %s199 = sphi 0, %s199
      %s201 = sphi 0, %s199
      %s202 = sphi 0, %s201
      %s216 = sphi 0, %s202
      %s222 = sphi 0, %s224
      %s225 = sphi 0, %s222
      %s226 = sphi 0, %s225
      %s242 = sphi 0, %s226
    $region4: #{tpu_custom_call.1} parent=1 // loop_header_branch
      %21 = sbr.rel (%p19) target = $region8
    $region5: #{tpu_custom_call.1} parent=1 // loop_body
      %s23 = ssub.s32 %s18, 1
      %s24 = ssub.s32 %s18, 2
      %s25 = sadd.s32 %s18, 1
      %s26 = ssub.s32 %s18, %s25
      %p27 = scmp.eq.s32.totalorder %s26, 0
      %s29 = sadd.s32 %s28, 1
      %s30 = scalar_select %p27, %s28, %s29
      %p33 = pneg %p27
      %p34 = scmp.eq.s32.totalorder %s18, 1
      %p35 = por %p33, %p34
      %p36 = scmp.ne.s32.totalorder %s28, %s31
      %p37 = scmp.eq.s32.totalorder %s18, 0
      %p38 = por %p36, %p37
      %p39 = scmp.ne.s32.totalorder %s28, %s31
      %p40 = scmp.eq.s32.totalorder %s23, 1
      %p41 = por %p39, %p40
      %p42 = scmp.ne.s32.totalorder %s31, %s32
      %p43 = scmp.eq.s32.totalorder %s23, 0
      %p44 = por %p42, %p43
      %p45 = scmp.ne.s32.totalorder %s31, %s32
      %p46 = scmp.eq.s32.totalorder %s24, 1
      %p47 = por %p45, %p46
      %p49 = scmp.ne.s32.totalorder %s32, %s48
      %p50 = scmp.eq.s32.totalorder %s24, 0
      %p51 = por %p49, %p50
      %s53 = sadd.s32 %s52, 1
      %p56 = scmp.eq.s32.totalorder %s18, 1
      %p57 = scmp.ne.s32.totalorder %s52, %s54
      %p58 = scmp.eq.s32.totalorder %s18, 0
      %p59 = por %p57, %p58
      %p60 = scmp.ne.s32.totalorder %s52, %s54
      %p61 = scmp.eq.s32.totalorder %s23, 1
      %p62 = por %p60, %p61
      %p63 = scmp.ne.s32.totalorder %s54, %s55
      %p64 = scmp.eq.s32.totalorder %s23, 0
      %p65 = por %p63, %p64
      %p66 = scmp.ne.s32.totalorder %s54, %s55
      %p67 = scmp.eq.s32.totalorder %s24, 1
      %p68 = por %p66, %p67
      %p70 = scmp.ne.s32.totalorder %s55, %s69
      %p71 = scmp.eq.s32.totalorder %s24, 0
      %p72 = por %p70, %p71
      %s74 = sadd.s32 %s73, 1
      %p77 = scmp.eq.s32.totalorder %s18, 1
      %p78 = scmp.ne.s32.totalorder %s73, %s75
      %p79 = scmp.eq.s32.totalorder %s18, 0
      %p80 = por %p78, %p79
      %p81 = scmp.ne.s32.totalorder %s73, %s75
      %p82 = scmp.eq.s32.totalorder %s23, 1
      %p83 = por %p81, %p82
      %p84 = scmp.ne.s32.totalorder %s75, %s76
      %p85 = scmp.eq.s32.totalorder %s23, 0
      %p86 = por %p84, %p85
      %p87 = scmp.ne.s32.totalorder %s75, %s76
      %p88 = scmp.eq.s32.totalorder %s24, 1
      %p89 = por %p87, %p88
      %p91 = scmp.ne.s32.totalorder %s76, %s90
      %p92 = scmp.eq.s32.totalorder %s24, 0
      %p93 = por %p91, %p92
      %s95 = sadd.s32 %s94, 1
      %p98 = scmp.eq.s32.totalorder %s18, 1
      %p99 = scmp.ne.s32.totalorder %s94, %s96
      %p100 = scmp.eq.s32.totalorder %s18, 0
      %p101 = por %p99, %p100
      %p102 = scmp.ne.s32.totalorder %s94, %s96
      %p103 = scmp.eq.s32.totalorder %s23, 1
      %p104 = por %p102, %p103
      %p105 = scmp.ne.s32.totalorder %s96, %s97
      %p106 = scmp.eq.s32.totalorder %s23, 0
      %p107 = por %p105, %p106
      %p108 = scmp.ne.s32.totalorder %s96, %s97
      %p109 = scmp.eq.s32.totalorder %s24, 1
      %p110 = por %p108, %p109
      %p112 = scmp.ne.s32.totalorder %s97, %s111
      %p113 = scmp.eq.s32.totalorder %s24, 0
      %p114 = por %p112, %p113
      %s116 = sadd.s32 %s115, 1
      %p119 = scmp.eq.s32.totalorder %s18, 1
      %p120 = scmp.ne.s32.totalorder %s115, %s117
      %p121 = scmp.eq.s32.totalorder %s18, 0
      %p122 = por %p120, %p121
      %p123 = scmp.ne.s32.totalorder %s115, %s117
      %p124 = scmp.eq.s32.totalorder %s23, 1
      %p125 = por %p123, %p124
      %p126 = scmp.ne.s32.totalorder %s117, %s118
      %p127 = scmp.eq.s32.totalorder %s23, 0
      %p128 = por %p126, %p127
      %p129 = scmp.ne.s32.totalorder %s117, %s118
      %p130 = scmp.eq.s32.totalorder %s24, 1
      %p131 = por %p129, %p130
      %p133 = scmp.ne.s32.totalorder %s118, %s132
      %p134 = scmp.eq.s32.totalorder %s24, 0
      %p135 = por %p133, %p134
      %s137 = sadd.s32 %s136, 1
      %p140 = scmp.eq.s32.totalorder %s18, 1
      %p141 = scmp.ne.s32.totalorder %s136, %s138
      %p142 = scmp.eq.s32.totalorder %s18, 0
      %p143 = por %p141, %p142
      %p144 = scmp.ne.s32.totalorder %s136, %s138
      %p145 = scmp.eq.s32.totalorder %s23, 1
      %p146 = por %p144, %p145
      %p147 = scmp.ne.s32.totalorder %s138, %s139
      %p148 = scmp.eq.s32.totalorder %s23, 0
      %p149 = por %p147, %p148
      %p150 = scmp.ne.s32.totalorder %s138, %s139
      %p151 = scmp.eq.s32.totalorder %s24, 1
      %p152 = por %p150, %p151
      %p154 = scmp.ne.s32.totalorder %s139, %s153
      %p155 = scmp.eq.s32.totalorder %s24, 0
      %p156 = por %p154, %p155
      %s158 = sadd.s32 %s157, 1
      %p161 = scmp.eq.s32.totalorder %s18, 1
      %p162 = scmp.ne.s32.totalorder %s157, %s159
      %p163 = scmp.eq.s32.totalorder %s18, 0
      %p164 = por %p162, %p163
      %p165 = scmp.ne.s32.totalorder %s157, %s159
      %p166 = scmp.eq.s32.totalorder %s23, 1
      %p167 = por %p165, %p166
      %p168 = scmp.ne.s32.totalorder %s159, %s160
      %p169 = scmp.eq.s32.totalorder %s23, 0
      %p170 = por %p168, %p169
      %p171 = scmp.ne.s32.totalorder %s159, %s160
      %p172 = scmp.eq.s32.totalorder %s24, 1
      %p173 = por %p171, %p172
      %p175 = scmp.ne.s32.totalorder %s160, %s174
      %p176 = scmp.eq.s32.totalorder %s24, 0
      %p177 = por %p175, %p176
      %s179 = sadd.s32 %s178, 1
      %p182 = scmp.eq.s32.totalorder %s18, 1
      %p183 = scmp.ne.s32.totalorder %s178, %s180
      %p184 = scmp.eq.s32.totalorder %s18, 0
      %p185 = por %p183, %p184
      %p186 = scmp.ne.s32.totalorder %s178, %s180
      %p187 = scmp.eq.s32.totalorder %s23, 1
      %p188 = por %p186, %p187
      %p189 = scmp.ne.s32.totalorder %s180, %s181
      %p190 = scmp.eq.s32.totalorder %s23, 0
      %p191 = por %p189, %p190
      %p192 = scmp.ne.s32.totalorder %s180, %s181
      %p193 = scmp.eq.s32.totalorder %s24, 1
      %p194 = por %p192, %p193
      %p196 = scmp.ne.s32.totalorder %s181, %s195
      %p197 = scmp.eq.s32.totalorder %s24, 0
      %p198 = por %p196, %p197
      %s200 = sadd.s32 %s199, 1
      %p203 = scmp.eq.s32.totalorder %s18, 1
      %p204 = scmp.ne.s32.totalorder %s199, %s201
      %p205 = scmp.eq.s32.totalorder %s18, 0
      %p206 = por %p204, %p205
      %p207 = scmp.ne.s32.totalorder %s199, %s201
      %p208 = scmp.eq.s32.totalorder %s23, 1
      %p209 = por %p207, %p208
      %p210 = scmp.ne.s32.totalorder %s201, %s202
      %p211 = scmp.eq.s32.totalorder %s23, 0
      %p212 = por %p210, %p211
      %p213 = scmp.ne.s32.totalorder %s201, %s202
      %p214 = scmp.eq.s32.totalorder %s24, 1
      %p215 = por %p213, %p214
      %p217 = scmp.ne.s32.totalorder %s202, %s216
      %p218 = scmp.eq.s32.totalorder %s24, 0
      %p219 = por %p217, %p218
      %s220 = ssub.s32 %s18, %s25
      %p221 = scmp.eq.s32.totalorder %s220, 0
      %s223 = sadd.s32 %s222, 1
      %s224 = scalar_select %p221, %s222, %s223
      %p227 = pneg %p221
      %p228 = scmp.eq.s32.totalorder %s18, 1
      %p229 = por %p227, %p228
      %p230 = scmp.ne.s32.totalorder %s222, %s225
      %p231 = scmp.eq.s32.totalorder %s18, 0
      %p232 = por %p230, %p231
      %p233 = scmp.ne.s32.totalorder %s222, %s225
      %p234 = scmp.eq.s32.totalorder %s23, 1
      %p235 = por %p233, %p234
      %p236 = scmp.ne.s32.totalorder %s225, %s226
      %p237 = scmp.eq.s32.totalorder %s23, 0
      %p238 = por %p236, %p237
      %p239 = scmp.ne.s32.totalorder %s225, %s226
      %p240 = scmp.eq.s32.totalorder %s24, 1
      %p241 = por %p239, %p240
      %p243 = scmp.ne.s32.totalorder %s226, %s242
      %p244 = scmp.eq.s32.totalorder %s24, 0
      %p245 = por %p243, %p244
      %p246 = scmp.le.s32.totalorder 1, %s18
      %p247 = scmp.lt.s32.totalorder %s18, 3
      %p248 = pnand %p246, %p247
      %p249 = pneg %p248
      // Predicated region
      $region9: #{tpu_custom_call.1} parent=5 // pred_check
        _
      $region10: #{tpu_custom_call.1} parent=5 // pred_check_branch
        %251 = sbr.rel (%p248) target = $region12
      $region11: #{tpu_custom_call.1} parent=5 // pred_region
        %s252 = ssub.s32 %s18, 1
        // Predicated region
        $region13: #{tpu_custom_call.1} parent=11 // pred_check
          %p253 = pneg %p65
        $region14: #{tpu_custom_call.1} parent=11 // pred_check_branch
          %255 = sbr.rel (%p253) target = $region16
        $region15: #{tpu_custom_call.1} parent=11 // pred_region
          _
        $region16: #{tpu_custom_call.1} parent=11 // pred_fallthru
          _
        // Predicated region
        $region17: #{tpu_custom_call.1} parent=11 // pred_check
          %p256 = pneg %p86
        $region18: #{tpu_custom_call.1} parent=11 // pred_check_branch
          %258 = sbr.rel (%p256) target = $region20
        $region19: #{tpu_custom_call.1} parent=11 // pred_region
          _
        $region20: #{tpu_custom_call.1} parent=11 // pred_fallthru
          _
        // Predicated region
        $region21: #{tpu_custom_call.1} parent=11 // pred_check
          %p259 = pneg %p107
        $region22: #{tpu_custom_call.1} parent=11 // pred_check_branch
          %261 = sbr.rel (%p259) target = $region24
        $region23: #{tpu_custom_call.1} parent=11 // pred_region
          _
        $region24: #{tpu_custom_call.1} parent=11 // pred_fallthru
          _
        // Predicated region
        $region25: #{tpu_custom_call.1} parent=11 // pred_check
          %p262 = pneg %p128
        $region26: #{tpu_custom_call.1} parent=11 // pred_check_branch
          %264 = sbr.rel (%p262) target = $region28
        $region27: #{tpu_custom_call.1} parent=11 // pred_region
          _
        $region28: #{tpu_custom_call.1} parent=11 // pred_fallthru
          _
        // Predicated region
        $region29: #{tpu_custom_call.1} parent=11 // pred_check
          %p265 = pneg %p149
        $region30: #{tpu_custom_call.1} parent=11 // pred_check_branch
          %267 = sbr.rel (%p265) target = $region32
        $region31: #{tpu_custom_call.1} parent=11 // pred_region
          _
        $region32: #{tpu_custom_call.1} parent=11 // pred_fallthru
          _
        // Predicated region
        $region33: #{tpu_custom_call.1} parent=11 // pred_check
          %p268 = pneg %p170
        $region34: #{tpu_custom_call.1} parent=11 // pred_check_branch
          %270 = sbr.rel (%p268) target = $region36
        $region35: #{tpu_custom_call.1} parent=11 // pred_region
          _
        $region36: #{tpu_custom_call.1} parent=11 // pred_fallthru
          _
        // Predicated region
        $region37: #{tpu_custom_call.1} parent=11 // pred_check
          %p271 = pneg %p191
        $region38: #{tpu_custom_call.1} parent=11 // pred_check_branch
          %273 = sbr.rel (%p271) target = $region40
        $region39: #{tpu_custom_call.1} parent=11 // pred_region
          _
        $region40: #{tpu_custom_call.1} parent=11 // pred_fallthru
          _
        // Predicated region
        $region41: #{tpu_custom_call.1} parent=11 // pred_check
          %p274 = pneg %p212
        $region42: #{tpu_custom_call.1} parent=11 // pred_check_branch
          %276 = sbr.rel (%p274) target = $region44
        $region43: #{tpu_custom_call.1} parent=11 // pred_region
          _
        $region44: #{tpu_custom_call.1} parent=11 // pred_fallthru
          _
      $region12: #{tpu_custom_call.1} parent=5 // pred_fallthru
        _
      %p277 = scmp.lt.s32.totalorder %s18, 2
      // Predicated region
      $region45: #{tpu_custom_call.1} parent=5 // pred_check
        %p278 = pneg %p277
      $region46: #{tpu_custom_call.1} parent=5 // pred_check_branch
        %280 = sbr.rel (%p278) target = $region48
      $region47: #{tpu_custom_call.1} parent=5 // pred_region
        // Predicated region
        $region49: #{tpu_custom_call.1} parent=47 // pred_check
          %p281 = pneg %p38
        $region50: #{tpu_custom_call.1} parent=47 // pred_check_branch
          %283 = sbr.rel (%p281) target = $region52
        $region51: #{tpu_custom_call.1} parent=47 // pred_region
          %p284 = scmp.lt.s32.totalorder %s18, 1
          %s285 = scalar_select %p284, %s18, 1
          %s286 = smul.addr %s285, 2
          %s287 = smul.addr %s286, 8
          %s288 = scalar_lea.vmem %s0, %s287
        $region52: #{tpu_custom_call.1} parent=47 // pred_fallthru
          _
      $region48: #{tpu_custom_call.1} parent=5 // pred_fallthru
        _
      %p289 = scmp.le.s32.totalorder 1, %s18
      %p290 = scmp.lt.s32.totalorder %s18, 3
      %p291 = pnand %p289, %p290
      %p292 = pneg %p291
      // Predicated region
      $region53: #{tpu_custom_call.1} parent=5 // pred_check
        _
      $region54: #{tpu_custom_call.1} parent=5 // pred_check_branch
        %294 = sbr.rel (%p291) target = $region56
      $region55: #{tpu_custom_call.1} parent=5 // pred_region
        %s295 = ssub.s32 %s18, 1
        %p296 = scmp.lt.s32.totalorder %s23, 1
        %s297 = scalar_select %p296, %s23, 1
        %s298 = smul.addr %s297, 2
        %s299 = smul.addr %s298, 8
        %s300 = scalar_lea.vmem %s0, %s299
        %p301 = pneg %p44
        %p302 = pneg %p41
        %p303 = pneg %p65
        %p304 = pneg %p62
        %p305 = pneg %p86
        %p306 = pneg %p83
        %p307 = pneg %p107
        %p308 = pneg %p104
        %p309 = pneg %p128
        %p310 = pneg %p125
        %p311 = pneg %p149
        %p312 = pneg %p146
        %p313 = pneg %p170
        %p314 = pneg %p167
        %p315 = pneg %p191
        %p316 = pneg %p188
        %p317 = pneg %p212
        %p318 = pneg %p209
        %p319 = pneg %p238
        %p320 = pneg %p235
        %s321 = sand.u32 %s225, 1
        %s322 = scalar_lea.sflag [#allocation3], %s321
        %s323 = sand.u32 %s225, 1
        %s324 = smul.addr %s323, 16
        %s325 = scalar_lea.vmem [#allocation2], %s324
        %p326 = scmp.lt.s32.totalorder %s23, 1
        %s327 = scalar_select %p326, %s23, 1
        %s328 = smul.addr %s327, 2
        %s329 = smul.addr %s328, 8
        %s330 = scalar_lea.vmem %s0, %s329
        %v332 = vld [vmem:[%s330] sm:$0xff]
        %v333 = vld [vmem:[%s330 + $0x8] sm:$0xff]
        %v334 = vld [vmem:[%s3] sm:$0xf]
        %v335 = vld [vmem:[%s3 + $0x4] sm:$0xf]
        %v336 = vpack.c.bf16 %v332, %v332
        %v337 = vpack.c.bf16 %v333, %v333
        %v338 = vld [vmem:[%s4] sm:$0xff]
        %v339 = vld [vmem:[%s4 + $0x8] sm:$0xff]
        %341 = vset.pattern.permute.xlu0 0
        %342 = vperm.xlu0 %341, %v338
        %v343 = vpop.permute.xlu0 %342
        %346 = vset.pattern.permute.xlu0 0
        %347 = vperm.xlu0 %346, %v339
        %v348 = vpop.permute.xlu0 %347
        %v352 = vunpack.c.l.b16 %v334
        %v353 = vunpack.c.l.b16 %v335
        %v354 = vpack.c.b16 %v353, %v352
        %vm355 = vcmask 64512
        %v357 = vsel %vm355, %v354, 0
        %vm359 = vcmask 1043456
        %v361 = vsel %vm359, %v336, 0
        %v364 = vsel %vm359, %v337, 0
        %366 = vmatprep.subr.bf16.mxu0 0
        %367 = vmatpush1.bf16.msra.mxu0 0
        %368 = vmatprep.subr.bf16.mxu0 0
        %369 = vmatpush1.bf16.msra.mxu0 0
        %370 = vmatprep.subr.bf16.mxu0 0
        %371 = vmatpush1.bf16.msra.mxu0 0
        %372 = vmatprep.subr.bf16.mxu0 0
        %373 = vmatpush1.bf16.msra.mxu0 0
        %374 = vmatprep.subr.bf16.mxu0 0
        %375 = vmatpush1.bf16.msra.mxu0 0
        %376 = vmatprep.subr.bf16.mxu0 0
        %377 = vmatpush1.bf16.msra.mxu0 0
        %378 = vmatprep.subr.bf16.mxu0 0
        %379 = vmatpush1.bf16.msra.mxu0 0
        %380 = vmatprep.subr.bf16.mxu0 %v364
        %381 = vmatpush1.bf16.msra.mxu0 %v361
        %382 = vmatprep.subr.bf16.mxu0 0
        %383 = vmatpush2.bf16.msra.mxu0 0
        %384 = vmatprep.subr.bf16.mxu0 0
        %385 = vmatpush2.bf16.msra.mxu0 0
        %386 = vmatprep.subr.bf16.mxu0 0
        %387 = vmatpush2.bf16.msra.mxu0 0
        %388 = vmatprep.subr.bf16.mxu0 0
        %389 = vmatpush2.bf16.msra.mxu0 0
        %390 = vmatprep.subr.bf16.mxu0 0
        %391 = vmatpush2.bf16.msra.mxu0 0
        %392 = vmatprep.subr.bf16.mxu0 0
        %393 = vmatpush2.bf16.msra.mxu0 0
        %394 = vmatprep.subr.bf16.mxu0 0
        %395 = vmatpush2.bf16.msra.mxu0 0
        %396 = vmatprep.subr.bf16.mxu0 0
        %397 = vmatpush2.bf16.msra.mxu0 0
        %398 = vmatprep.mubr.bf16.mxu0 0
        %399 = vmatmul.mubr.bf16.gmra.mxu0 %v357
        %v400 = vpop.f32.mrf.mxu0
        %v401 = vadd.f32 %v343, %v400
        %v402 = vpop.f32.mrf.mxu0
        %v403 = vadd.f32 %v343, %v402
        %v404 = vpop.f32.mrf.mxu0
        %v405 = vadd.f32 %v348, %v404
        %v406 = vpop.f32.mrf.mxu0
        %v407 = vadd.f32 %v348, %v406
        %408 = vdwg.mxu0
        %v409 = vmax.f32 %v401, 0.0
        %v410 = vmax.f32 %v403, 0.0
        %v411 = vmax.f32 %v405, 0.0
        %v412 = vmax.f32 %v407, 0.0
        %v413 = vmin.f32 %v409, 6.0
        %v414 = vmin.f32 %v410, 6.0
        %v415 = vmin.f32 %v411, 6.0
        %v416 = vmin.f32 %v412, 6.0
        %v417 = vld [vmem:[%s1] sm:$0x3]
        %v418 = vld [vmem:[%s2] sm:$0x3]
        %vm419 = vcmp.ge.s32.totalorder %v417, 1
        %vm420 = vcmp.le.s32.totalorder %v417, 14
        %vm421 = vcmp.ge.s32.totalorder %v418, 1
        %vm422 = vcmp.le.s32.totalorder %v418, 14
        %v423 = vld [vmem:[%s5] sm:$0xff]
        %v424 = vld [vmem:[%s5 + $0x8] sm:$0xff]
        %426 = vset.pattern.permute.xlu0 4
        %427 = vperm.xlu0 %426, %v423
        %v428 = vpop.permute.xlu0 %427
        %431 = vset.pattern.permute.xlu0 4
        %432 = vperm.xlu0 %431, %v424
        %v433 = vpop.permute.xlu0 %432
        %v435 = vmul.f32 %v413, %v428
        %v436 = vmul.f32 %v414, %v428
        %v437 = vmul.f32 %v415, %v433
        %v438 = vmul.f32 %v416, %v433
        %439 = vrot.lane.b32.xlu0 %v413, 17
        %v440 = vpop.permute.xlu0 %439
        %441 = vrot.lane.b32.xlu0 %v415, 17
        %v442 = vpop.permute.xlu0 %441
        %443 = vrot.lane.b32.xlu0 %v414, 17
        %v444 = vpop.permute.xlu0 %443
        %445 = vrot.lane.b32.xlu0 %v416, 17
        %v446 = vpop.permute.xlu0 %445
        %v447 = vlaneseq
        %v448 = vand.u32 %v447, 127
        %vm449 = vcmp.lt.s32.totalorder %v448, 17
        %v450 = vsel %vm449, %v440, %v444
        %v451 = vsel %vm449, %v442, %v446
        %v452 = vsel %vm449, %v444, %v440
        %v453 = vsel %vm449, %v446, %v442
        %vm454 = vmand %vm419, %vm421
        %v455 = vsel %vm454, 1, 0
        %v456 = vlaneseq
        %v457 = vshrl.u32 %v456, 7
        %v458 = vsub.s32 0, %v457
        %v459 = vrot.slane %v455, %v458
        %v460 = vlaneseq
        %v461 = vshrl.u32 %v460, 7
        %v462 = vsub.s32 1, %v461
        %v463 = vrot.slane %v455, %v462
        %vm464 = vcmp.eq.s32.totalorder %v459, 1
        %vm465 = vcmp.eq.s32.totalorder %v463, 1
        %v466 = vsel %vm464, %v452, 0.0
        %v467 = vsel %vm465, %v450, 0.0
        %v468 = vsel %vm464, %v453, 0.0
        %v469 = vsel %vm465, %v451, 0.0
        %470 = vset.pattern.permute.xlu0 0
        %471 = vperm.xlu0 %470, %v423
        %v472 = vpop.permute.xlu0 %471
        %474 = vset.pattern.permute.xlu0 0
        %475 = vperm.xlu0 %474, %v424
        %v476 = vpop.permute.xlu0 %475
        %v478 = vmul.f32 %v466, %v472
        %v479 = vmul.f32 %v467, %v472
        %v480 = vmul.f32 %v468, %v476
        %v481 = vmul.f32 %v469, %v476
        %v482 = vadd.f32 %v435, %v478
        %v483 = vadd.f32 %v436, %v479
        %v484 = vadd.f32 %v437, %v480
        %v485 = vadd.f32 %v438, %v481
        %486 = vrot.lane.b32.xlu0 %v413, 16
        %v487 = vpop.permute.xlu0 %486
        %488 = vrot.lane.b32.xlu0 %v415, 16
        %v489 = vpop.permute.xlu0 %488
        %490 = vrot.lane.b32.xlu0 %v414, 16
        %v491 = vpop.permute.xlu0 %490
        %492 = vrot.lane.b32.xlu0 %v416, 16
        %v493 = vpop.permute.xlu0 %492
        %vm494 = vcmp.lt.s32.totalorder %v448, 16
        %v495 = vsel %vm494, %v487, %v491
        %v496 = vsel %vm494, %v489, %v493
        %v497 = vsel %vm494, %v491, %v487
        %v498 = vsel %vm494, %v493, %v489
        %v499 = vsel %vm419, 1, 0
        %v500 = vlaneseq
        %v501 = vshrl.u32 %v500, 7
        %v502 = vsub.s32 0, %v501
        %v503 = vrot.slane %v499, %v502
        %v504 = vlaneseq
        %v505 = vshrl.u32 %v504, 7
        %v506 = vsub.s32 1, %v505
        %v507 = vrot.slane %v499, %v506
        %vm508 = vcmp.eq.s32.totalorder %v503, 1
        %vm509 = vcmp.eq.s32.totalorder %v507, 1
        %v510 = vsel %vm508, %v497, 0.0
        %v511 = vsel %vm509, %v495, 0.0
        %v512 = vsel %vm508, %v498, 0.0
        %v513 = vsel %vm509, %v496, 0.0
        %514 = vset.pattern.permute.xlu0 1
        %515 = vperm.xlu0 %514, %v423
        %v516 = vpop.permute.xlu0 %515
        %518 = vset.pattern.permute.xlu0 1
        %519 = vperm.xlu0 %518, %v424
        %v520 = vpop.permute.xlu0 %519
        %v522 = vmul.f32 %v510, %v516
        %v523 = vmul.f32 %v511, %v516
        %v524 = vmul.f32 %v512, %v520
        %v525 = vmul.f32 %v513, %v520
        %v526 = vadd.f32 %v482, %v522
        %v527 = vadd.f32 %v483, %v523
        %v528 = vadd.f32 %v484, %v524
        %v529 = vadd.f32 %v485, %v525
        %530 = vrot.lane.b32.xlu0 %v413, 15
        %v531 = vpop.permute.xlu0 %530
        %532 = vrot.lane.b32.xlu0 %v415, 15
        %v533 = vpop.permute.xlu0 %532
        %534 = vrot.lane.b32.xlu0 %v414, 15
        %v535 = vpop.permute.xlu0 %534
        %536 = vrot.lane.b32.xlu0 %v416, 15
        %v537 = vpop.permute.xlu0 %536
        %vm538 = vcmp.lt.s32.totalorder %v448, 15
        %v539 = vsel %vm538, %v531, %v535
        %v540 = vsel %vm538, %v533, %v537
        %v541 = vsel %vm538, %v535, %v531
        %v542 = vsel %vm538, %v537, %v533
        %vm543 = vmand %vm419, %vm422
        %v544 = vsel %vm543, 1, 0
        %v545 = vlaneseq
        %v546 = vshrl.u32 %v545, 7
        %v547 = vsub.s32 0, %v546
        %v548 = vrot.slane %v544, %v547
        %v549 = vlaneseq
        %v550 = vshrl.u32 %v549, 7
        %v551 = vsub.s32 1, %v550
        %v552 = vrot.slane %v544, %v551
        %vm553 = vcmp.eq.s32.totalorder %v548, 1
        %vm554 = vcmp.eq.s32.totalorder %v552, 1
        %v555 = vsel %vm553, %v541, 0.0
        %v556 = vsel %vm554, %v539, 0.0
        %v557 = vsel %vm553, %v542, 0.0
        %v558 = vsel %vm554, %v540, 0.0
        %559 = vset.pattern.permute.xlu0 2
        %560 = vperm.xlu0 %559, %v423
        %v561 = vpop.permute.xlu0 %560
        %563 = vset.pattern.permute.xlu0 2
        %564 = vperm.xlu0 %563, %v424
        %v565 = vpop.permute.xlu0 %564
        %v567 = vmul.f32 %v555, %v561
        %v568 = vmul.f32 %v556, %v561
        %v569 = vmul.f32 %v557, %v565
        %v570 = vmul.f32 %v558, %v565
        %v571 = vadd.f32 %v526, %v567
        %v572 = vadd.f32 %v527, %v568
        %v573 = vadd.f32 %v528, %v569
        %v574 = vadd.f32 %v529, %v570
        %575 = vrot.lane.b32.xlu0 %v413, 1
        %v576 = vpop.permute.xlu0 %575
        %577 = vrot.lane.b32.xlu0 %v415, 1
        %v578 = vpop.permute.xlu0 %577
        %579 = vrot.lane.b32.xlu0 %v414, 1
        %v580 = vpop.permute.xlu0 %579
        %581 = vrot.lane.b32.xlu0 %v416, 1
        %v582 = vpop.permute.xlu0 %581
        %vm583 = vcmp.lt.s32.totalorder %v448, 1
        %v584 = vsel %vm583, %v576, %v580
        %v585 = vsel %vm583, %v578, %v582
        %v586 = vsel %vm583, %v580, %v576
        %v587 = vsel %vm583, %v582, %v578
        %v588 = vsel %vm421, 1, 0
        %v589 = vlaneseq
        %v590 = vshrl.u32 %v589, 7
        %v591 = vsub.s32 0, %v590
        %v592 = vrot.slane %v588, %v591
        %v593 = vlaneseq
        %v594 = vshrl.u32 %v593, 7
        %v595 = vsub.s32 1, %v594
        %v596 = vrot.slane %v588, %v595
        %vm597 = vcmp.eq.s32.totalorder %v592, 1
        %vm598 = vcmp.eq.s32.totalorder %v596, 1
        %v599 = vsel %vm597, %v586, 0.0
        %v600 = vsel %vm598, %v584, 0.0
        %v601 = vsel %vm597, %v587, 0.0
        %v602 = vsel %vm598, %v585, 0.0
        %603 = vset.pattern.permute.xlu0 3
        %604 = vperm.xlu0 %603, %v423
        %v605 = vpop.permute.xlu0 %604
        %607 = vset.pattern.permute.xlu0 3
        %608 = vperm.xlu0 %607, %v424
        %v609 = vpop.permute.xlu0 %608
        %v611 = vmul.f32 %v599, %v605
        %v612 = vmul.f32 %v600, %v605
        %v613 = vmul.f32 %v601, %v609
        %v614 = vmul.f32 %v602, %v609
        %v615 = vadd.f32 %v571, %v611
        %v616 = vadd.f32 %v572, %v612
        %v617 = vadd.f32 %v573, %v613
        %v618 = vadd.f32 %v574, %v614
        %619 = vrot.lane.b32.xlu0 %v413, 127
        %v620 = vpop.permute.xlu0 %619
        %621 = vrot.lane.b32.xlu0 %v415, 127
        %v622 = vpop.permute.xlu0 %621
        %623 = vrot.lane.b32.xlu0 %v414, 127
        %v624 = vpop.permute.xlu0 %623
        %625 = vrot.lane.b32.xlu0 %v416, 127
        %v626 = vpop.permute.xlu0 %625
        %vm627 = vcmp.lt.s32.totalorder %v448, 127
        %v628 = vsel %vm627, %v620, %v624
        %v629 = vsel %vm627, %v622, %v626
        %v630 = vsel %vm627, %v624, %v620
        %v631 = vsel %vm627, %v626, %v622
        %v632 = vsel %vm422, 1, 0
        %v633 = vlaneseq
        %v634 = vshrl.u32 %v633, 7
        %v635 = vsub.s32 0, %v634
        %v636 = vrot.slane %v632, %v635
        %v637 = vlaneseq
        %v638 = vshrl.u32 %v637, 7
        %v639 = vsub.s32 1, %v638
        %v640 = vrot.slane %v632, %v639
        %vm641 = vcmp.eq.s32.totalorder %v636, 1
        %vm642 = vcmp.eq.s32.totalorder %v640, 1
        %v643 = vsel %vm641, %v628, 0.0
        %v644 = vsel %vm642, %v630, 0.0
        %v645 = vsel %vm641, %v629, 0.0
        %v646 = vsel %vm642, %v631, 0.0
        %647 = vset.pattern.permute.xlu0 5
        %648 = vperm.xlu0 %647, %v423
        %v649 = vpop.permute.xlu0 %648
        %651 = vset.pattern.permute.xlu0 5
        %652 = vperm.xlu0 %651, %v424
        %v653 = vpop.permute.xlu0 %652
        %v655 = vmul.f32 %v643, %v649
        %v656 = vmul.f32 %v644, %v649
        %v657 = vmul.f32 %v645, %v653
        %v658 = vmul.f32 %v646, %v653
        %v659 = vadd.f32 %v615, %v655
        %v660 = vadd.f32 %v616, %v656
        %v661 = vadd.f32 %v617, %v657
        %v662 = vadd.f32 %v618, %v658
        %663 = vrot.lane.b32.xlu0 %v413, 113
        %v664 = vpop.permute.xlu0 %663
        %665 = vrot.lane.b32.xlu0 %v415, 113
        %v666 = vpop.permute.xlu0 %665
        %667 = vrot.lane.b32.xlu0 %v414, 113
        %v668 = vpop.permute.xlu0 %667
        %669 = vrot.lane.b32.xlu0 %v416, 113
        %v670 = vpop.permute.xlu0 %669
        %vm671 = vcmp.lt.s32.totalorder %v448, 113
        %v672 = vsel %vm671, %v664, %v668
        %v673 = vsel %vm671, %v666, %v670
        %v674 = vsel %vm671, %v668, %v664
        %v675 = vsel %vm671, %v670, %v666
        %vm676 = vmand %vm420, %vm421
        %v677 = vsel %vm676, 1, 0
        %v678 = vlaneseq
        %v679 = vshrl.u32 %v678, 7
        %v680 = vsub.s32 0, %v679
        %v681 = vrot.slane %v677, %v680
        %v682 = vlaneseq
        %v683 = vshrl.u32 %v682, 7
        %v684 = vsub.s32 1, %v683
        %v685 = vrot.slane %v677, %v684
        %vm686 = vcmp.eq.s32.totalorder %v681, 1
        %vm687 = vcmp.eq.s32.totalorder %v685, 1
        %v688 = vsel %vm686, %v672, 0.0
        %v689 = vsel %vm687, %v674, 0.0
        %v690 = vsel %vm686, %v673, 0.0
        %v691 = vsel %vm687, %v675, 0.0
        %692 = vset.pattern.permute.xlu0 6
        %693 = vperm.xlu0 %692, %v423
        %v694 = vpop.permute.xlu0 %693
        %696 = vset.pattern.permute.xlu0 6
        %697 = vperm.xlu0 %696, %v424
        %v698 = vpop.permute.xlu0 %697
        %v700 = vmul.f32 %v688, %v694
        %v701 = vmul.f32 %v689, %v694
        %v702 = vmul.f32 %v690, %v698
        %v703 = vmul.f32 %v691, %v698
        %v704 = vadd.f32 %v659, %v700
        %v705 = vadd.f32 %v660, %v701
        %v706 = vadd.f32 %v661, %v702
        %v707 = vadd.f32 %v662, %v703
        %708 = vrot.lane.b32.xlu0 %v413, 112
        %v709 = vpop.permute.xlu0 %708
        %710 = vrot.lane.b32.xlu0 %v415, 112
        %v711 = vpop.permute.xlu0 %710
        %712 = vrot.lane.b32.xlu0 %v414, 112
        %v713 = vpop.permute.xlu0 %712
        %714 = vrot.lane.b32.xlu0 %v416, 112
        %v715 = vpop.permute.xlu0 %714
        %vm716 = vcmp.lt.s32.totalorder %v448, 112
        %v717 = vsel %vm716, %v709, %v713
        %v718 = vsel %vm716, %v711, %v715
        %v719 = vsel %vm716, %v713, %v709
        %v720 = vsel %vm716, %v715, %v711
        %v721 = vsel %vm420, 1, 0
        %v722 = vlaneseq
        %v723 = vshrl.u32 %v722, 7
        %v724 = vsub.s32 0, %v723
        %v725 = vrot.slane %v721, %v724
        %v726 = vlaneseq
        %v727 = vshrl.u32 %v726, 7
        %v728 = vsub.s32 1, %v727
        %v729 = vrot.slane %v721, %v728
        %vm730 = vcmp.eq.s32.totalorder %v725, 1
        %vm731 = vcmp.eq.s32.totalorder %v729, 1
        %v732 = vsel %vm730, %v717, 0.0
        %v733 = vsel %vm731, %v719, 0.0
        %v734 = vsel %vm730, %v718, 0.0
        %v735 = vsel %vm731, %v720, 0.0
        %736 = vset.pattern.permute.xlu0 7
        %737 = vperm.xlu0 %736, %v423
        %v738 = vpop.permute.xlu0 %737
        %740 = vset.pattern.permute.xlu0 7
        %741 = vperm.xlu0 %740, %v424
        %v742 = vpop.permute.xlu0 %741
        %v744 = vmul.f32 %v732, %v738
        %v745 = vmul.f32 %v733, %v738
        %v746 = vmul.f32 %v734, %v742
        %v747 = vmul.f32 %v735, %v742
        %v748 = vadd.f32 %v704, %v744
        %v749 = vadd.f32 %v705, %v745
        %v750 = vadd.f32 %v706, %v746
        %v751 = vadd.f32 %v707, %v747
        %752 = vrot.lane.b32.xlu0 %v413, 111
        %v753 = vpop.permute.xlu0 %752
        %754 = vrot.lane.b32.xlu0 %v415, 111
        %v755 = vpop.permute.xlu0 %754
        %756 = vrot.lane.b32.xlu0 %v414, 111
        %v757 = vpop.permute.xlu0 %756
        %758 = vrot.lane.b32.xlu0 %v416, 111
        %v759 = vpop.permute.xlu0 %758
        %vm760 = vcmp.lt.s32.totalorder %v448, 111
        %v761 = vsel %vm760, %v753, %v757
        %v762 = vsel %vm760, %v755, %v759
        %v763 = vsel %vm760, %v757, %v753
        %v764 = vsel %vm760, %v759, %v755
        %vm765 = vmand %vm420, %vm422
        %v766 = vsel %vm765, 1, 0
        %v767 = vlaneseq
        %v768 = vshrl.u32 %v767, 7
        %v769 = vsub.s32 0, %v768
        %v770 = vrot.slane %v766, %v769
        %v771 = vlaneseq
        %v772 = vshrl.u32 %v771, 7
        %v773 = vsub.s32 1, %v772
        %v774 = vrot.slane %v766, %v773
        %vm775 = vcmp.eq.s32.totalorder %v770, 1
        %vm776 = vcmp.eq.s32.totalorder %v774, 1
        %v777 = vsel %vm775, %v761, 0.0
        %v778 = vsel %vm776, %v763, 0.0
        %v779 = vsel %vm775, %v762, 0.0
        %v780 = vsel %vm776, %v764, 0.0
        %781 = vset.pattern.permute.xlu0 8
        %782 = vperm.xlu0 %781, %v423
        %v783 = vpop.permute.xlu0 %782
        %785 = vset.pattern.permute.xlu0 8
        %786 = vperm.xlu0 %785, %v424
        %v787 = vpop.permute.xlu0 %786
        %v789 = vmul.f32 %v777, %v783
        %v790 = vmul.f32 %v778, %v783
        %v791 = vmul.f32 %v779, %v787
        %v792 = vmul.f32 %v780, %v787
        %v793 = vadd.f32 %v748, %v789
        %v794 = vadd.f32 %v749, %v790
        %v795 = vadd.f32 %v750, %v791
        %v796 = vadd.f32 %v751, %v792
        %v797 = vld [vmem:[%s6] sm:$0xff]
        %v798 = vld [vmem:[%s6 + $0x8] sm:$0xff]
        %800 = vset.pattern.permute.xlu0 0
        %801 = vperm.xlu0 %800, %v797
        %v802 = vpop.permute.xlu0 %801
        %805 = vset.pattern.permute.xlu0 0
        %806 = vperm.xlu0 %805, %v798
        %v807 = vpop.permute.xlu0 %806
        %v809 = vadd.f32 %v793, %v802
        %v810 = vadd.f32 %v794, %v802
        %v811 = vadd.f32 %v795, %v807
        %v812 = vadd.f32 %v796, %v807
        %v813 = vmax.f32 %v809, 0.0
        %v814 = vmax.f32 %v810, 0.0
        %v815 = vmax.f32 %v811, 0.0
        %v816 = vmax.f32 %v812, 0.0
        %v817 = vmin.f32 %v813, 6.0
        %v818 = vmin.f32 %v814, 6.0
        %v819 = vmin.f32 %v815, 6.0
        %v820 = vmin.f32 %v816, 6.0
        %v821 = vld [vmem:[%s7] sm:$0xf]
        %v822 = vpack.c.bf16 %v819, %v817
        %v823 = vpack.c.bf16 %v820, %v818
        %v824 = vld [vmem:[%s8] sm:$0xff]
        %826 = vset.pattern.permute.xlu0 0
        %827 = vperm.xlu0 %826, %v824
        %v828 = vpop.permute.xlu0 %827
        %vm830 = vcmask 130048
        %v832 = vsel %vm830, %v821, 0
        %834 = vmatprep.subr.bf16.mxu0 0
        %835 = vmatpush1.bf16.msra.mxu0 0
        %836 = vmatprep.subr.bf16.mxu0 0
        %837 = vmatpush1.bf16.msra.mxu0 0
        %838 = vmatprep.subr.bf16.mxu0 0
        %839 = vmatpush1.bf16.msra.mxu0 0
        %840 = vmatprep.subr.bf16.mxu0 0
        %841 = vmatpush1.bf16.msra.mxu0 0
        %842 = vmatprep.subr.bf16.mxu0 0
        %843 = vmatpush1.bf16.msra.mxu0 0
        %844 = vmatprep.subr.bf16.mxu0 0
        %845 = vmatpush1.bf16.msra.mxu0 0
        %846 = vmatprep.subr.bf16.mxu0 0
        %847 = vmatpush1.bf16.msra.mxu0 0
        %848 = vmatprep.subr.bf16.mxu0 %v823
        %849 = vmatpush1.bf16.msra.mxu0 %v822
        %850 = vmatprep.subr.bf16.mxu0 0
        %851 = vmatpush2.bf16.msra.mxu0 0
        %852 = vmatprep.subr.bf16.mxu0 0
        %853 = vmatpush2.bf16.msra.mxu0 0
        %854 = vmatprep.subr.bf16.mxu0 0
        %855 = vmatpush2.bf16.msra.mxu0 0
        %856 = vmatprep.subr.bf16.mxu0 0
        %857 = vmatpush2.bf16.msra.mxu0 0
        %858 = vmatprep.subr.bf16.mxu0 0
        %859 = vmatpush2.bf16.msra.mxu0 0
        %860 = vmatprep.subr.bf16.mxu0 0
        %861 = vmatpush2.bf16.msra.mxu0 0
        %862 = vmatprep.subr.bf16.mxu0 0
        %863 = vmatpush2.bf16.msra.mxu0 0
        %864 = vmatprep.subr.bf16.mxu0 0
        %865 = vmatpush2.bf16.msra.mxu0 0
        %866 = vmatprep.mubr.bf16.mxu0 0
        %867 = vmatmul.mubr.bf16.gmra.mxu0 %v832
        %v868 = vpop.f32.mrf.mxu0
        %v869 = vadd.f32 %v828, %v868
        %v870 = vpop.f32.mrf.mxu0
        %v871 = vadd.f32 %v828, %v870
        %v872 = vpop.f32.mrf.mxu0
        %v873 = vpop.f32.mrf.mxu0
        %874 = vdwg.mxu0
        %v875 = vadd.f32 %v869, %v332
        %v876 = vadd.f32 %v871, %v333
        %877 = vst [vmem:[%s325] sm:$0xff] %v875
        %878 = vst [vmem:[%s325 + $0x8] sm:$0xff] %v876
        %s879 = sand.u32 %s225, 1
        %s880 = scalar_lea.sflag [#allocation3], %s879
        %s881 = sand.u32 %s225, 1
        %s882 = smul.addr %s881, 16
        %s883 = scalar_lea.vmem [#allocation2], %s882
        // Predicated region
        $region57: #{tpu_custom_call.1} parent=55 // pred_check
          %p884 = pneg %p235
        $region58: #{tpu_custom_call.1} parent=55 // pred_check_branch
          %886 = sbr.rel (%p884) target = $region60
        $region59: #{tpu_custom_call.1} parent=55 // pred_region
          %s888 = ssub.s32 256, 256
          %889 = vsyncadd %s880, %s888
          %s890 = smul.addr %s23, 2
          %s891 = smul.addr %s890, 128
          %s892 = scalar_lea.hbm %s9, %s891
          %s894 = sshll.u32 %s883, 4
          %s895 = int_to_ptr.vmem [resolvable:$true] %s894
          %897 = dma.vmem_to_hbm [thread:$0]  %s895, 256, %s892, %s880
        $region60: #{tpu_custom_call.1} parent=55 // pred_fallthru
          _
      $region56: #{tpu_custom_call.1} parent=5 // pred_fallthru
        _
      %p898 = scmp.le.s32.totalorder 2, %s18
      // Predicated region
      $region61: #{tpu_custom_call.1} parent=5 // pred_check
        %p899 = pneg %p898
      $region62: #{tpu_custom_call.1} parent=5 // pred_check_branch
        %901 = sbr.rel (%p899) target = $region64
      $region63: #{tpu_custom_call.1} parent=5 // pred_region
        %s902 = ssub.s32 %s18, 2
        // Predicated region
        $region65: #{tpu_custom_call.1} parent=63 // pred_check
          %p903 = pneg %p241
        $region66: #{tpu_custom_call.1} parent=63 // pred_check_branch
          %905 = sbr.rel (%p903) target = $region68
        $region67: #{tpu_custom_call.1} parent=63 // pred_region
          %s906 = sand.u32 %s226, 1
          %s907 = scalar_lea.sflag [#allocation3], %s906
          %s908 = sand.u32 %s226, 1
          %s909 = smul.addr %s908, 16
          %s910 = scalar_lea.vmem [#allocation2], %s909
          %911 = dma.done %s907, 256
        $region68: #{tpu_custom_call.1} parent=63 // pred_fallthru
          _
      $region64: #{tpu_custom_call.1} parent=5 // pred_fallthru
        _
    $region6: #{tpu_custom_call.1} parent=1 // loop_footer
      %s22 = sadd.s32 1, %s18
    $region7: #{tpu_custom_call.1} parent=1 // loop_footer_branch
      %17 = sbr.rel target = $region3
    $region8: #{tpu_custom_call.1} parent=1 // loop_exit
      _
    %912 = vsyncpa [#allocation3], 1
    %s913 = scalar_lea.sflag [#allocation3], 1
    %914 = vsyncpa %s913, 1

</llo_original>
